<compile_context>
chip_gen: v7x
topology: tpu7x:2x2x1
jax: 0.10.0
libtpu: 0.0.40
codegen_flags: <defaults>
</compile_context>

<pallas_src>
import math

import jax
import jax.numpy as jnp
from jax.experimental import pallas as pl
from jax.experimental.pallas import tpu as pltpu


# ---------------------------------------------------------------------------
# Pallas kernel
# ---------------------------------------------------------------------------
def _rope_kernel(x_ref, cos_ref, sin_ref, o_ref):
    # Blocks (leading batch dim squeezed): x / o / cos / sin are all (tr, L).
    x = x_ref[...]
    L = x.shape[-1]
    # Cyclic lane rotations (XLU).  Wrap-around lanes are never selected by the
    # parity mask below (lane 0 is even -> takes roll(L-1); last lane is odd ->
    # takes roll(+1)), so the cyclic wrap cannot leak into valid outputs.
    x_prev = pltpu.roll(x, 1, axis=1)        # x[..., i-1]
    x_next = pltpu.roll(x, L - 1, axis=1)    # x[..., i+1]
    lane = jax.lax.broadcasted_iota(jnp.int32, x.shape, 1)
    swapped = jnp.where(lane % 2 == 0, x_next, x_prev)   # pair swap (2k <-> 2k+1)
    o_ref[...] = x * cos_ref[...] + swapped * sin_ref[...]


# ---------------------------------------------------------------------------
# Tiling helpers
# ---------------------------------------------------------------------------
def _choose_tiles(N, max_tile_elems=256 * 1024, max_lanes=1024):
    """Lane-dense layout for a flat length-N feature axis.

    Returns (Np, L, R, tr): padded length (multiple of 128), lane width
    (multiple of 128 dividing Np), row count R = Np // L, and row-tile tr
    (multiple of 8 or == R) targeting ~max_tile_elems f32 per tile (~1 MiB).
    """
    Np = -(-N // 128) * 128                  # pad flat axis up to lane multiple
    L = 128
    cand = max_lanes
    while cand >= 128:
        if Np % cand == 0:
            L = cand
            break
        cand -= 128
    R = Np // L
    max_rows = max(8, (max_tile_elems // L) // 8 * 8)
    tr = 0
    t = 8
    while t <= min(R, max_rows):
        if R % t == 0:
            tr = t
        t += 8
    if tr == 0:
        tr = R if R * L <= max_tile_elems else max_rows   # full-dim or ragged
    return Np, L, R, tr


def _rope_apply(x, cos2, sins, tr):
    """x: (B, R, L) f32; cos2/sins: (R, L) f32 -> out (B, R, L) f32."""
    B, R, L = x.shape
    grid = (pl.cdiv(R, tr), B)               # rows OUTER, batch INNER: table
                                             # block index constant across the
                                             # inner axis -> no re-DMA per batch
    x_spec = pl.BlockSpec((None, tr, L), lambda j, b: (b, j, 0))
    t_spec = pl.BlockSpec((tr, L), lambda j, b: (j, 0))

    cost = pl.CostEstimate(
        flops=3 * B * R * L,                 # 2 mul + 1 add per element
        transcendentals=0,
        bytes_accessed=4 * (2 * B * R * L + 2 * R * L),  # x + out + tables(once)
    )

    return pl.pallas_call(
        _rope_kernel,
        grid=grid,
        in_specs=[x_spec, t_spec, t_spec],
        out_specs=x_spec,
        out_shape=jax.ShapeDtypeStruct((B, R, L), jnp.float32),
        compiler_params=pltpu.CompilerParams(
            dimension_semantics=("parallel", "parallel"),
            vmem_limit_bytes=32 * 1024 * 1024),
        cost_estimate=cost,
    )(x, cos2, sins)


@jax.jit
def _rope_forward(x, cos2, sins):
    """x: (..., *channel_dims, C); cos2/sins: (*channel_dims, C) fused tables."""
    t_shape = cos2.shape
    N = math.prod(t_shape)
    lead = x.shape[: x.ndim - len(t_shape)]
    B = math.prod(lead) if lead else 1

    xf = x.astype(jnp.float32).reshape(B, N)          # torch: force f32
    cos_f = cos2.reshape(N)
    sin_f = sins.reshape(N)

    Np, L, R, tr = _choose_tiles(N)
    if Np != N:                                       # lane-pad instead of masked stores
        pad = Np - N
        xf = jnp.pad(xf, ((0, 0), (0, pad)))
        cos_f = jnp.pad(cos_f, (0, pad))
        sin_f = jnp.pad(sin_f, (0, pad))

    out = _rope_apply(xf.reshape(B, R, L),
                      cos_f.reshape(R, L),
                      sin_f.reshape(R, L), tr)

    out = out.reshape(B, Np)
    if Np != N:
        out = out[:, :N]
    return out.reshape(x.shape)


# ---------------------------------------------------------------------------
# RoPE module (JAX/Pallas port of the PyTorch module)
# ---------------------------------------------------------------------------
class RoPE:
    def __init__(self, shape, base=10000):
        channel_dims, feature_dim = tuple(shape[:-1]), int(shape[-1])
        k_max = feature_dim // (2 * len(channel_dims))
        assert feature_dim % k_max == 0
        assert feature_dim == 2 * len(channel_dims) * k_max

        theta_ks = 1.0 / (base ** (jnp.arange(k_max, dtype=jnp.float32) / k_max))
        grids = jnp.meshgrid(
            *[jnp.arange(d, dtype=jnp.float32) for d in channel_dims],
            indexing="ij")
        angles = jnp.concatenate([g[..., None] * theta_ks for g in grids],
                                 axis=-1)             # channel_dims + (C//2,)
        cos = jnp.cos(angles)
        sin = jnp.sin(angles)
        # Plain tables (kept only for the reference check; == 'rotations' buffer).
        self.cos = cos
        self.sin = sin
        # Fused-kernel tables, interleaved to match x's (re, im) pair layout:
        #   cos2[..., 2k] = cos2[..., 2k+1] = cos[..., k]
        #   sins[..., 2k] = -sin[..., k] ; sins[..., 2k+1] = +sin[..., k]
        self.cos2 = jnp.stack([cos, cos], axis=-1).reshape(*channel_dims, feature_dim)
        self.sins = jnp.stack([-sin, sin], axis=-1).reshape(*channel_dims, feature_dim)
        self.channel_dims = channel_dims
        self.feature_dim = feature_dim

    def __call__(self, x):
        nc = len(self.channel_dims)
        assert x.shape[-1] == self.feature_dim, x.shape
        assert tuple(x.shape[x.ndim - 1 - nc: -1]) == self.channel_dims, x.shape
        return _rope_forward(x, self.cos2, self.sins)


# ---------------------------------------------------------------------------
# Pure-JAX reference for correctness checking
# ---------------------------------------------------------------------------
def rope_reference(x, cos, sin):
    lead, C = x.shape[:-1], x.shape[-1]
    xr = x.astype(jnp.float32).reshape(*lead, C // 2, 2)
    xe, xo = xr[..., 0], xr[..., 1]
    oe = xe * cos - xo * sin
    oo = xo * cos + xe * sin
    return jnp.stack([oe, oo], axis=-1).reshape(*lead, C)


# ---------------------------------------------------------------------------
if __name__ == "__main__":
    key = jax.random.PRNGKey(0)

    # Main case: shape=(H, W, C) -> k_max = 8, lane-dense path (N % 128 == 0).
    B, H, W, C = 2, 16, 16, 32
    x = jax.random.normal(key, (B, H, W, C), jnp.float32)
    rope = RoPE((H, W, C))
    y = jax.block_until_ready(rope(x))
    assert y.shape == (B, H, W, C), y.shape
    assert bool(jnp.all(jnp.isfinite(y)))
    ref = rope_reference(x, rope.cos, rope.sin)
    max_err = float(jnp.max(jnp.abs(y - ref)))
    assert max_err < 1e-5, f"mismatch vs reference: {max_err}"

    # Small odd-shaped case exercising the lane-padding fallback (N % 128 != 0).
    x2 = jax.random.normal(jax.random.PRNGKey(1), (2, 5, 6), jnp.float32)
    rope2 = RoPE((5, 6))
    y2 = jax.block_until_ready(rope2(x2))
    ref2 = rope_reference(x2, rope2.cos, rope2.sin)
    max_err2 = float(jnp.max(jnp.abs(y2 - ref2)))
    assert max_err2 < 1e-5, f"padded-path mismatch vs reference: {max_err2}"

    print("KERNEL_OK")
</pallas_src>

<mosaic_0001>
module attributes {stable_mosaic.version = 11 : i64} {
  func.func @_rope_kernel(%arg0: i32, %arg1: i32, %arg2: memref<1x8x1024xf32, #tpu.memory_space<vmem>>, %arg3: memref<8x1024xf32, #tpu.memory_space<vmem>>, %arg4: memref<8x1024xf32, #tpu.memory_space<vmem>>, %arg5: memref<1x8x1024xf32, #tpu.memory_space<vmem>>) attributes {dimension_semantics = [#tpu.dimension_semantics<parallel>, #tpu.dimension_semantics<parallel>], iteration_bounds = array<i64: 1, 2>, scalar_prefetch = 0 : i64, scratch_operands = 0 : i64, tpu.core_type = #tpu.core_type<tc>, window_params = [{transform_indices = @transform_0, window_bounds = array<i64: 1, 8, 1024>}, {transform_indices = @transform_1, window_bounds = array<i64: 8, 1024>}, {transform_indices = @transform_2, window_bounds = array<i64: 8, 1024>}, {transform_indices = @transform_3, window_bounds = array<i64: 1, 8, 1024>}]} {
    %c0 = arith.constant 0 : index
    %c0_0 = arith.constant 0 : index
    %c0_1 = arith.constant 0 : index
    %0 = vector.load %arg2[%c0, %c0_0, %c0_1] : memref<1x8x1024xf32, #tpu.memory_space<vmem>>, vector<1x8x1024xf32>
    %1 = vector.shape_cast %0 : vector<1x8x1024xf32> to vector<8x1024xf32>
    %c1_i32 = arith.constant 1 : i32
    %2 = tpu.dynamic_rotate %1 by %c1_i32 dim 1 : vector<8x1024xf32>, i32 -> vector<8x1024xf32>
    %c1023_i32 = arith.constant 1023 : i32
    %3 = tpu.dynamic_rotate %1 by %c1023_i32 dim 1 : vector<8x1024xf32>, i32 -> vector<8x1024xf32>
    %4 = tpu.iota {dimensions = array<i32: 1>} : vector<8x1024xi32>
    %c2_i32 = arith.constant 2 : i32
    %c0_i32 = arith.constant 0 : i32
    %5 = arith.cmpi eq, %c2_i32, %c0_i32 : i32
    %c1_i32_2 = arith.constant 1 : i32
    %6 = arith.select %5, %c1_i32_2, %c2_i32 : i32
    %7 = vector.broadcast %6 : i32 to vector<8x1024xi32>
    %8 = arith.remsi %4, %7 : vector<8x1024xi32>
    %c0_i32_3 = arith.constant 0 : i32
    %9 = vector.broadcast %c0_i32_3 : i32 to vector<8x1024xi32>
    %10 = arith.cmpi ne, %8, %9 : vector<8x1024xi32>
    %c0_i32_4 = arith.constant 0 : i32
    %11 = vector.broadcast %c0_i32_4 : i32 to vector<8x1024xi32>
    %12 = arith.cmpi slt, %8, %11 : vector<8x1024xi32>
    %c0_i32_5 = arith.constant 0 : i32
    %13 = arith.cmpi slt, %6, %c0_i32_5 : i32
    %14 = vector.broadcast %13 : i1 to vector<8x1024xi1>
    %15 = vector.broadcast %14 : vector<8x1024xi1> to vector<8x1024xi1>
    %16 = arith.xori %12, %15 : vector<8x1024xi1>
    %17 = arith.andi %16, %10 : vector<8x1024xi1>
    %18 = vector.broadcast %6 : i32 to vector<8x1024xi32>
    %19 = arith.addi %8, %18 : vector<8x1024xi32>
    %20 = arith.select %17, %19, %8 : vector<8x1024xi1>, vector<8x1024xi32>
    %c0_i32_6 = arith.constant 0 : i32
    %21 = vector.broadcast %c0_i32_6 : i32 to vector<8x1024xi32>
    %22 = arith.cmpi eq, %20, %21 : vector<8x1024xi32>
    %23 = arith.select %22, %3, %2 : vector<8x1024xi1>, vector<8x1024xf32>
    %c0_7 = arith.constant 0 : index
    %c0_8 = arith.constant 0 : index
    %24 = vector.load %arg3[%c0_7, %c0_8] : memref<8x1024xf32, #tpu.memory_space<vmem>>, vector<8x1024xf32>
    %25 = arith.mulf %1, %24 : vector<8x1024xf32>
    %c0_9 = arith.constant 0 : index
    %c0_10 = arith.constant 0 : index
    %26 = vector.load %arg4[%c0_9, %c0_10] : memref<8x1024xf32, #tpu.memory_space<vmem>>, vector<8x1024xf32>
    %27 = arith.mulf %23, %26 : vector<8x1024xf32>
    %28 = arith.addf %25, %27 : vector<8x1024xf32>
    %c0_11 = arith.constant 0 : index
    %c0_12 = arith.constant 0 : index
    %c0_13 = arith.constant 0 : index
    %29 = vector.load %arg5[%c0_11, %c0_12, %c0_13] : memref<1x8x1024xf32, #tpu.memory_space<vmem>>, vector<1x8x1024xf32>
    %30 = vector.shape_cast %29 : vector<1x8x1024xf32> to vector<8x1024xf32>
    %31 = vector.shape_cast %28 : vector<8x1024xf32> to vector<1x8x1024xf32>
    tpu.vector_store %arg5[%c0_11, %c0_12, %c0_13], %31 {strides = array<i32>} : memref<1x8x1024xf32, #tpu.memory_space<vmem>>, vector<1x8x1024xf32>,
    return
  }
  func.func @transform_0(%arg0: i32, %arg1: i32) -> (i32, i32, i32) {
    %c0_i32 = arith.constant 0 : i32
    %c0_i32_0 = arith.constant 0 : i32
    return %arg1, %arg0, %c0_i32 : i32, i32, i32
  }
  func.func @transform_1(%arg0: i32, %arg1: i32) -> (i32, i32) {
    %c0_i32 = arith.constant 0 : i32
    %c0_i32_0 = arith.constant 0 : i32
    return %arg0, %c0_i32 : i32, i32
  }
  func.func @transform_2(%arg0: i32, %arg1: i32) -> (i32, i32) {
    %c0_i32 = arith.constant 0 : i32
    %c0_i32_0 = arith.constant 0 : i32
    return %arg0, %c0_i32 : i32, i32
  }
  func.func @transform_3(%arg0: i32, %arg1: i32) -> (i32, i32, i32) {
    %c0_i32 = arith.constant 0 : i32
    %c0_i32_0 = arith.constant 0 : i32
    return %arg1, %arg0, %c0_i32 : i32, i32, i32
  }
}

</mosaic_0001>

<llo_original>
// kernel: _rope_forward.1
$region0: #{_rope_forward.1}
  #allocation0 [shape = 'u32[]', space=smem, size = 0x4, offset = 0x4, fixed_abs, tag = 'smem constant byte address 0x4 - core index']
  #allocation1 [shape = 'u32[144,128]{1,0:T(1,128)}', space=vmem, size = 0x12000, scoped, tag = 'internal scratch']
  %s0 = inlined_call_operand.vmem [shape: f32[2,8,1024], index: 0, kind: input, shape index: {}]
  %s1 = inlined_call_operand.vmem [shape: f32[8,1024], index: 1, kind: input, shape index: {}]
  %s2 = inlined_call_operand.vmem [shape: f32[8,1024], index: 2, kind: input, shape index: {}]
  %s3 = inlined_call_operand.vmem [shape: f32[2,8,1024], index: 3, kind: output, shape index: {}]
  %s4 = sld [smem:[#allocation0]]
  $region45: #{_rope_forward.1} parent=0
    _
  %s6 = ssub.s32 1, %s4
  %s7 = scalar_select 0, %s6, %s4
  loop: start=0, step=1, limit=4
  $region2: #{_rope_forward.1} parent=0 // loop_pre_header
    _
  $region3: #{_rope_forward.1} parent=0 // loop_header
    %s9 = sphi 0, %s13
    %p10 = scmp.ge.s32.totalorder %s9, 4
    %s16 = sphi 0, %s28
    %s17 = sphi 0, %s24
    %s18 = sphi 0, %s16
    %s19 = sphi 0, %s17
    %s20 = sphi 0, %s18
    %s21 = sphi 0, %s19
    %s33 = sphi 0, %s35
    %s36 = sphi 0, %s33
    %s37 = sphi 0, %s36
    %s53 = sphi 0, %s37
    %s59 = sphi 0, %s61
    %s62 = sphi 0, %s59
    %s63 = sphi 0, %s62
    %s79 = sphi 0, %s63
    %s85 = sphi 0, %s87
    %s88 = sphi 0, %s85
    %s89 = sphi 0, %s88
    %s105 = sphi 0, %s89
    %s113 = sphi 0, %s115
    %s116 = sphi 0, %s113
    %s117 = sphi 0, %s116
    %s133 = sphi 0, %s117
  $region4: #{_rope_forward.1} parent=0 // loop_header_branch
    %12 = sbr.rel (%p10) target = $region8
  $region5: #{_rope_forward.1} parent=0 // loop_body
    %s14 = ssub.s32 %s9, 1
    %s15 = ssub.s32 %s9, 2
    %s22 = sadd.s32 1, %s17
    %p23 = scmp.ge.s32.totalorder %s22, 2
    %s24 = scalar_select %p23, 0, %s22
    %s25 = sadd.s32 1, %s16
    %s26 = scalar_select %p23, %s25, %s16
    %p27 = scmp.ge.s32.totalorder %s26, 1
    %s28 = scalar_select %p27, 0, %s26
    %s29 = ssub.s32 %s17, %s24
    %s30 = ssub.s32 %s16, %s28
    %s31 = sor.u32 %s29, %s30
    %p32 = scmp.eq.s32.totalorder %s31, 0
    %s34 = sadd.s32 %s33, 1
    %s35 = scalar_select %p32, %s33, %s34
    %p38 = pneg %p32
    %p39 = scmp.eq.s32.totalorder %s9, 1
    %p40 = por %p38, %p39
    %p41 = scmp.ne.s32.totalorder %s33, %s36
    %p42 = scmp.eq.s32.totalorder %s9, 0
    %p43 = por %p41, %p42
    %p44 = scmp.ne.s32.totalorder %s33, %s36
    %p45 = scmp.eq.s32.totalorder %s14, 1
    %p46 = por %p44, %p45
    %p47 = scmp.ne.s32.totalorder %s36, %s37
    %p48 = scmp.eq.s32.totalorder %s14, 0
    %p49 = por %p47, %p48
    %p50 = scmp.ne.s32.totalorder %s36, %s37
    %p51 = scmp.eq.s32.totalorder %s15, 1
    %p52 = por %p50, %p51
    %p54 = scmp.ne.s32.totalorder %s37, %s53
    %p55 = scmp.eq.s32.totalorder %s15, 0
    %p56 = por %p54, %p55
    %s57 = ssub.s32 %s16, %s28
    %p58 = scmp.eq.s32.totalorder %s57, 0
    %s60 = sadd.s32 %s59, 1
    %s61 = scalar_select %p58, %s59, %s60
    %p64 = pneg %p58
    %p65 = scmp.eq.s32.totalorder %s9, 1
    %p66 = por %p64, %p65
    %p67 = scmp.ne.s32.totalorder %s59, %s62
    %p68 = scmp.eq.s32.totalorder %s9, 0
    %p69 = por %p67, %p68
    %p70 = scmp.ne.s32.totalorder %s59, %s62
    %p71 = scmp.eq.s32.totalorder %s14, 1
    %p72 = por %p70, %p71
    %p73 = scmp.ne.s32.totalorder %s62, %s63
    %p74 = scmp.eq.s32.totalorder %s14, 0
    %p75 = por %p73, %p74
    %p76 = scmp.ne.s32.totalorder %s62, %s63
    %p77 = scmp.eq.s32.totalorder %s15, 1
    %p78 = por %p76, %p77
    %p80 = scmp.ne.s32.totalorder %s63, %s79
    %p81 = scmp.eq.s32.totalorder %s15, 0
    %p82 = por %p80, %p81
    %s83 = ssub.s32 %s16, %s28
    %p84 = scmp.eq.s32.totalorder %s83, 0
    %s86 = sadd.s32 %s85, 1
    %s87 = scalar_select %p84, %s85, %s86
    %p90 = pneg %p84
    %p91 = scmp.eq.s32.totalorder %s9, 1
    %p92 = por %p90, %p91
    %p93 = scmp.ne.s32.totalorder %s85, %s88
    %p94 = scmp.eq.s32.totalorder %s9, 0
    %p95 = por %p93, %p94
    %p96 = scmp.ne.s32.totalorder %s85, %s88
    %p97 = scmp.eq.s32.totalorder %s14, 1
    %p98 = por %p96, %p97
    %p99 = scmp.ne.s32.totalorder %s88, %s89
    %p100 = scmp.eq.s32.totalorder %s14, 0
    %p101 = por %p99, %p100
    %p102 = scmp.ne.s32.totalorder %s88, %s89
    %p103 = scmp.eq.s32.totalorder %s15, 1
    %p104 = por %p102, %p103
    %p106 = scmp.ne.s32.totalorder %s89, %s105
    %p107 = scmp.eq.s32.totalorder %s15, 0
    %p108 = por %p106, %p107
    %s109 = ssub.s32 %s17, %s24
    %s110 = ssub.s32 %s16, %s28
    %s111 = sor.u32 %s109, %s110
    %p112 = scmp.eq.s32.totalorder %s111, 0
    %s114 = sadd.s32 %s113, 1
    %s115 = scalar_select %p112, %s113, %s114
    %p118 = pneg %p112
    %p119 = scmp.eq.s32.totalorder %s9, 1
    %p120 = por %p118, %p119
    %p121 = scmp.ne.s32.totalorder %s113, %s116
    %p122 = scmp.eq.s32.totalorder %s9, 0
    %p123 = por %p121, %p122
    %p124 = scmp.ne.s32.totalorder %s113, %s116
    %p125 = scmp.eq.s32.totalorder %s14, 1
    %p126 = por %p124, %p125
    %p127 = scmp.ne.s32.totalorder %s116, %s117
    %p128 = scmp.eq.s32.totalorder %s14, 0
    %p129 = por %p127, %p128
    %p130 = scmp.ne.s32.totalorder %s116, %s117
    %p131 = scmp.eq.s32.totalorder %s15, 1
    %p132 = por %p130, %p131
    %p134 = scmp.ne.s32.totalorder %s117, %s133
    %p135 = scmp.eq.s32.totalorder %s15, 0
    %p136 = por %p134, %p135
    %p137 = scmp.le.s32.totalorder 1, %s9
    %p138 = scmp.lt.s32.totalorder %s9, 3
    %p139 = pnand %p137, %p138
    %p140 = pneg %p139
    // Predicated region
    $region9: #{_rope_forward.1} parent=5 // pred_check
      _
    $region10: #{_rope_forward.1} parent=5 // pred_check_branch
      %142 = sbr.rel (%p139) target = $region12
    $region11: #{_rope_forward.1} parent=5 // pred_region
      %s143 = ssub.s32 %s9, 1
      // Predicated region
      $region13: #{_rope_forward.1} parent=11 // pred_check
        %p144 = pneg %p75
      $region14: #{_rope_forward.1} parent=11 // pred_check_branch
        %146 = sbr.rel (%p144) target = $region16
      $region15: #{_rope_forward.1} parent=11 // pred_region
        %p147 = scmp.lt.s32.totalorder %s18, 0
        %s148 = scalar_select %p147, %s18, 0
        %s149 = smul.addr %s148, 8
        %s150 = smul.addr %s149, 8
        %s151 = scalar_lea.vmem %s1, %s150
      $region16: #{_rope_forward.1} parent=11 // pred_fallthru
        _
      // Predicated region
      $region17: #{_rope_forward.1} parent=11 // pred_check
        %p152 = pneg %p101
      $region18: #{_rope_forward.1} parent=11 // pred_check_branch
        %154 = sbr.rel (%p152) target = $region20
      $region19: #{_rope_forward.1} parent=11 // pred_region
        %p155 = scmp.lt.s32.totalorder %s18, 0
        %s156 = scalar_select %p155, %s18, 0
        %s157 = smul.addr %s156, 8
        %s158 = smul.addr %s157, 8
        %s159 = scalar_lea.vmem %s2, %s158
      $region20: #{_rope_forward.1} parent=11 // pred_fallthru
        _
    $region12: #{_rope_forward.1} parent=5 // pred_fallthru
      _
    %p160 = scmp.lt.s32.totalorder %s9, 2
    // Predicated region
    $region21: #{_rope_forward.1} parent=5 // pred_check
      %p161 = pneg %p160
    $region22: #{_rope_forward.1} parent=5 // pred_check_branch
      %163 = sbr.rel (%p161) target = $region24
    $region23: #{_rope_forward.1} parent=5 // pred_region
      // Predicated region
      $region25: #{_rope_forward.1} parent=23 // pred_check
        %p164 = pneg %p43
      $region26: #{_rope_forward.1} parent=23 // pred_check_branch
        %166 = sbr.rel (%p164) target = $region28
      $region27: #{_rope_forward.1} parent=23 // pred_region
        %p167 = scmp.lt.s32.totalorder %s17, 1
        %s168 = scalar_select %p167, %s17, 1
        %p169 = scmp.lt.s32.totalorder %s16, 0
        %s170 = scalar_select %p169, %s16, 0
        %s171 = smul.addr %s170, 8
        %s172 = smul.addr %s168, 8
        %s173 = sadd.s32 %s171, %s172
        %s174 = smul.addr %s173, 8
        %s175 = scalar_lea.vmem %s0, %s174
      $region28: #{_rope_forward.1} parent=23 // pred_fallthru
        _
    $region24: #{_rope_forward.1} parent=5 // pred_fallthru
      _
    %p176 = scmp.le.s32.totalorder 1, %s9
    %p177 = scmp.lt.s32.totalorder %s9, 3
    %p178 = pnand %p176, %p177
    %p179 = pneg %p178
    // Predicated region
    $region29: #{_rope_forward.1} parent=5 // pred_check
      _
    $region30: #{_rope_forward.1} parent=5 // pred_check_branch
      %181 = sbr.rel (%p178) target = $region32
    $region31: #{_rope_forward.1} parent=5 // pred_region
      %s182 = ssub.s32 %s9, 1
      %p183 = scmp.lt.s32.totalorder %s19, 1
      %s184 = scalar_select %p183, %s19, 1
      %p185 = scmp.lt.s32.totalorder %s18, 0
      %s186 = scalar_select %p185, %s18, 0
      %s187 = smul.addr %s186, 8
      %s188 = smul.addr %s184, 8
      %s189 = sadd.s32 %s187, %s188
      %s190 = smul.addr %s189, 8
      %s191 = scalar_lea.vmem %s0, %s190
      %p192 = pneg %p49
      %p193 = pneg %p46
      %p194 = scmp.lt.s32.totalorder %s18, 0
      %s195 = scalar_select %p194, %s18, 0
      %s196 = smul.addr %s195, 8
      %s197 = smul.addr %s196, 8
      %s198 = scalar_lea.vmem %s1, %s197
      %p199 = pneg %p75
      %p200 = pneg %p72
      %p201 = scmp.lt.s32.totalorder %s18, 0
      %s202 = scalar_select %p201, %s18, 0
      %s203 = smul.addr %s202, 8
      %s204 = smul.addr %s203, 8
      %s205 = scalar_lea.vmem %s2, %s204
      %p206 = pneg %p101
      %p207 = pneg %p98
      %p208 = pneg %p129
      %p209 = pneg %p126
      %p210 = scmp.lt.s32.totalorder %s19, 1
      %s211 = scalar_select %p210, %s19, 1
      %p212 = scmp.lt.s32.totalorder %s18, 0
      %s213 = scalar_select %p212, %s18, 0
      %s214 = smul.addr %s213, 8
      %s215 = smul.addr %s211, 8
      %s216 = sadd.s32 %s214, %s215
      %s217 = smul.addr %s216, 8
      %s218 = scalar_lea.vmem %s3, %s217
      %p219 = scmp.lt.s32.totalorder %s19, 1
      %s220 = scalar_select %p219, %s19, 1
      %p221 = scmp.lt.s32.totalorder %s18, 0
      %s222 = scalar_select %p221, %s18, 0
      %s223 = smul.addr %s222, 8
      %s224 = smul.addr %s220, 8
      %s225 = sadd.s32 %s223, %s224
      %s226 = smul.addr %s225, 8
      %s227 = scalar_lea.vmem %s0, %s226
      %p228 = scmp.lt.s32.totalorder %s18, 0
      %s229 = scalar_select %p228, %s18, 0
      %s230 = smul.addr %s229, 8
      %s231 = smul.addr %s230, 8
      %s232 = scalar_lea.vmem %s1, %s231
      %p233 = scmp.lt.s32.totalorder %s18, 0
      %s234 = scalar_select %p233, %s18, 0
      %s235 = smul.addr %s234, 8
      %s236 = smul.addr %s235, 8
      %s237 = scalar_lea.vmem %s2, %s236
      %p238 = scmp.lt.s32.totalorder %s19, 1
      %s239 = scalar_select %p238, %s19, 1
      %p240 = scmp.lt.s32.totalorder %s18, 0
      %s241 = scalar_select %p240, %s18, 0
      %s242 = smul.addr %s241, 8
      %s243 = smul.addr %s239, 8
      %s244 = sadd.s32 %s242, %s243
      %s245 = smul.addr %s244, 8
      %s246 = scalar_lea.vmem %s3, %s245
      %v247 = vld [vmem:[%s227] sm:$0xff]
      %v248 = vld [vmem:[%s227 + $0x8] sm:$0xff]
      %v249 = vld [vmem:[%s227 + $0x10] sm:$0xff]
      %v250 = vld [vmem:[%s227 + $0x18] sm:$0xff]
      %v251 = vld [vmem:[%s227 + $0x20] sm:$0xff]
      %v252 = vld [vmem:[%s227 + $0x28] sm:$0xff]
      %v253 = vld [vmem:[%s227 + $0x30] sm:$0xff]
      %v254 = vld [vmem:[%s227 + $0x38] sm:$0xff]
      %255 = vrot.lane.b32.xlu0 %v247, 1
      %v256 = vpop.permute.xlu0 %255
      %257 = vrot.lane.b32.xlu0 %v248, 1
      %v258 = vpop.permute.xlu0 %257
      %259 = vrot.lane.b32.xlu0 %v249, 1
      %v260 = vpop.permute.xlu0 %259
      %261 = vrot.lane.b32.xlu0 %v250, 1
      %v262 = vpop.permute.xlu0 %261
      %263 = vrot.lane.b32.xlu0 %v251, 1
      %v264 = vpop.permute.xlu0 %263
      %265 = vrot.lane.b32.xlu0 %v252, 1
      %v266 = vpop.permute.xlu0 %265
      %267 = vrot.lane.b32.xlu0 %v253, 1
      %v268 = vpop.permute.xlu0 %267
      %269 = vrot.lane.b32.xlu0 %v254, 1
      %v270 = vpop.permute.xlu0 %269
      %v271 = vlaneseq
      %v272 = vand.u32 %v271, 127
      %vm273 = vcmp.lt.s32.totalorder %v272, 1
      %v274 = vsel %vm273, %v268, %v270
      %v275 = vsel %vm273, %v266, %v268
      %v276 = vsel %vm273, %v264, %v266
      %v277 = vsel %vm273, %v262, %v264
      %v278 = vsel %vm273, %v260, %v262
      %v279 = vsel %vm273, %v258, %v260
      %v280 = vsel %vm273, %v256, %v258
      %v281 = vsel %vm273, %v270, %v256
      %282 = vrot.lane.b32.xlu0 %v247, 127
      %v283 = vpop.permute.xlu0 %282
      %284 = vrot.lane.b32.xlu0 %v248, 127
      %v285 = vpop.permute.xlu0 %284
      %286 = vrot.lane.b32.xlu0 %v249, 127
      %v287 = vpop.permute.xlu0 %286
      %288 = vrot.lane.b32.xlu0 %v250, 127
      %v289 = vpop.permute.xlu0 %288
      %290 = vrot.lane.b32.xlu0 %v251, 127
      %v291 = vpop.permute.xlu0 %290
      %292 = vrot.lane.b32.xlu0 %v252, 127
      %v293 = vpop.permute.xlu0 %292
      %294 = vrot.lane.b32.xlu0 %v253, 127
      %v295 = vpop.permute.xlu0 %294
      %296 = vrot.lane.b32.xlu0 %v254, 127
      %v297 = vpop.permute.xlu0 %296
      %vm298 = vcmp.lt.s32.totalorder %v272, 127
      %v299 = vsel %vm298, %v295, %v297
      %v300 = vsel %vm298, %v293, %v295
      %v301 = vsel %vm298, %v291, %v293
      %v302 = vsel %vm298, %v289, %v291
      %v303 = vsel %vm298, %v287, %v289
      %v304 = vsel %vm298, %v285, %v287
      %v305 = vsel %vm298, %v283, %v285
      %v306 = vsel %vm298, %v297, %v283
      %v307 = vadd.s32 %v272, 128
      %v308 = vadd.s32 %v272, 256
      %v309 = vadd.s32 %v272, 384
      %v310 = vadd.s32 %v272, 512
      %v311 = vadd.s32 %v272, 640
      %v312 = vadd.s32 %v272, 768
      %v313 = vadd.s32 %v272, 896
      %vm314 = vcmp.lt.s32.totalorder %v272, 0
      %v315 = vsub.s32 0, %v272
      %v316 = vsel %vm314, %v315, %v272
      %v317 = vshrl.u32 %v316, 1
      %v318 = vand.u32 %v316, 1
      %v319 = vsub.s32 0, %v318
      %v320 = vsel %vm314, %v319, %v318
      %vm321 = vcmp.lt.s32.totalorder %v307, 0
      %v322 = vsub.s32 0, %v307
      %v323 = vsel %vm321, %v322, %v307
      %v324 = vshrl.u32 %v323, 1
      %v325 = vand.u32 %v323, 1
      %v326 = vsub.s32 0, %v325
      %v327 = vsel %vm321, %v326, %v325
      %vm328 = vcmp.lt.s32.totalorder %v308, 0
      %v329 = vsub.s32 0, %v308
      %v330 = vsel %vm328, %v329, %v308
      %v331 = vshrl.u32 %v330, 1
      %v332 = vand.u32 %v330, 1
      %v333 = vsub.s32 0, %v332
      %v334 = vsel %vm328, %v333, %v332
      %vm335 = vcmp.lt.s32.totalorder %v309, 0
      %v336 = vsub.s32 0, %v309
      %v337 = vsel %vm335, %v336, %v309
      %v338 = vshrl.u32 %v337, 1
      %v339 = vand.u32 %v337, 1
      %v340 = vsub.s32 0, %v339
      %v341 = vsel %vm335, %v340, %v339
      %vm342 = vcmp.lt.s32.totalorder %v310, 0
      %v343 = vsub.s32 0, %v310
      %v344 = vsel %vm342, %v343, %v310
      %v345 = vshrl.u32 %v344, 1
      %v346 = vand.u32 %v344, 1
      %v347 = vsub.s32 0, %v346
      %v348 = vsel %vm342, %v347, %v346
      %vm349 = vcmp.lt.s32.totalorder %v311, 0
      %v350 = vsub.s32 0, %v311
      %v351 = vsel %vm349, %v350, %v311
      %v352 = vshrl.u32 %v351, 1
      %v353 = vand.u32 %v351, 1
      %v354 = vsub.s32 0, %v353
      %v355 = vsel %vm349, %v354, %v353
      %vm356 = vcmp.lt.s32.totalorder %v312, 0
      %v357 = vsub.s32 0, %v312
      %v358 = vsel %vm356, %v357, %v312
      %v359 = vshrl.u32 %v358, 1
      %v360 = vand.u32 %v358, 1
      %v361 = vsub.s32 0, %v360
      %v362 = vsel %vm356, %v361, %v360
      %vm363 = vcmp.lt.s32.totalorder %v313, 0
      %v364 = vsub.s32 0, %v313
      %v365 = vsel %vm363, %v364, %v313
      %v366 = vshrl.u32 %v365, 1
      %v367 = vand.u32 %v365, 1
      %v368 = vsub.s32 0, %v367
      %v369 = vsel %vm363, %v368, %v367
      %vm370 = vcmp.ne.s32.totalorder %v320, 0
      %vm371 = vcmp.ne.s32.totalorder %v327, 0
      %vm372 = vcmp.ne.s32.totalorder %v334, 0
      %vm373 = vcmp.ne.s32.totalorder %v341, 0
      %vm374 = vcmp.ne.s32.totalorder %v348, 0
      %vm375 = vcmp.ne.s32.totalorder %v355, 0
      %vm376 = vcmp.ne.s32.totalorder %v362, 0
      %vm377 = vcmp.ne.s32.totalorder %v369, 0
      %vm378 = vcmp.lt.s32.totalorder %v320, 0
      %vm379 = vcmp.lt.s32.totalorder %v327, 0
      %vm380 = vcmp.lt.s32.totalorder %v334, 0
      %vm381 = vcmp.lt.s32.totalorder %v341, 0
      %vm382 = vcmp.lt.s32.totalorder %v348, 0
      %vm383 = vcmp.lt.s32.totalorder %v355, 0
      %vm384 = vcmp.lt.s32.totalorder %v362, 0
      %vm385 = vcmp.lt.s32.totalorder %v369, 0
      %vm386 = vmand %vm378, %vm370
      %vm387 = vmand %vm379, %vm371
      %vm388 = vmand %vm380, %vm372
      %vm389 = vmand %vm381, %vm373
      %vm390 = vmand %vm382, %vm374
      %vm391 = vmand %vm383, %vm375
      %vm392 = vmand %vm384, %vm376
      %vm393 = vmand %vm385, %vm377
      %v394 = vadd.s32 %v320, 2
      %v395 = vadd.s32 %v327, 2
      %v396 = vadd.s32 %v334, 2
      %v397 = vadd.s32 %v341, 2
      %v398 = vadd.s32 %v348, 2
      %v399 = vadd.s32 %v355, 2
      %v400 = vadd.s32 %v362, 2
      %v401 = vadd.s32 %v369, 2
      %v402 = vsel %vm386, %v394, %v320
      %v403 = vsel %vm387, %v395, %v327
      %v404 = vsel %vm388, %v396, %v334
      %v405 = vsel %vm389, %v397, %v341
      %v406 = vsel %vm390, %v398, %v348
      %v407 = vsel %vm391, %v399, %v355
      %v408 = vsel %vm392, %v400, %v362
      %v409 = vsel %vm393, %v401, %v369
      %vm410 = vcmp.eq.s32.totalorder %v402, 0
      %vm411 = vcmp.eq.s32.totalorder %v403, 0
      %vm412 = vcmp.eq.s32.totalorder %v404, 0
      %vm413 = vcmp.eq.s32.totalorder %v405, 0
      %vm414 = vcmp.eq.s32.totalorder %v406, 0
      %vm415 = vcmp.eq.s32.totalorder %v407, 0
      %vm416 = vcmp.eq.s32.totalorder %v408, 0
      %vm417 = vcmp.eq.s32.totalorder %v409, 0
      %v418 = vsel %vm410, %v305, %v281
      %v419 = vsel %vm411, %v304, %v280
      %v420 = vsel %vm412, %v303, %v279
      %v421 = vsel %vm413, %v302, %v278
      %v422 = vsel %vm414, %v301, %v277
      %v423 = vsel %vm415, %v300, %v276
      %v424 = vsel %vm416, %v299, %v275
      %v425 = vsel %vm417, %v306, %v274
      %v426 = vld [vmem:[%s232] sm:$0xff]
      %v427 = vld [vmem:[%s232 + $0x8] sm:$0xff]
      %v428 = vld [vmem:[%s232 + $0x10] sm:$0xff]
      %v429 = vld [vmem:[%s232 + $0x18] sm:$0xff]
      %v430 = vld [vmem:[%s232 + $0x20] sm:$0xff]
      %v431 = vld [vmem:[%s232 + $0x28] sm:$0xff]
      %v432 = vld [vmem:[%s232 + $0x30] sm:$0xff]
      %v433 = vld [vmem:[%s232 + $0x38] sm:$0xff]
      %v434 = vmul.f32 %v247, %v426
      %v435 = vmul.f32 %v248, %v427
      %v436 = vmul.f32 %v249, %v428
      %v437 = vmul.f32 %v250, %v429
      %v438 = vmul.f32 %v251, %v430
      %v439 = vmul.f32 %v252, %v431
      %v440 = vmul.f32 %v253, %v432
      %v441 = vmul.f32 %v254, %v433
      %v442 = vld [vmem:[%s237] sm:$0xff]
      %v443 = vld [vmem:[%s237 + $0x8] sm:$0xff]
      %v444 = vld [vmem:[%s237 + $0x10] sm:$0xff]
      %v445 = vld [vmem:[%s237 + $0x18] sm:$0xff]
      %v446 = vld [vmem:[%s237 + $0x20] sm:$0xff]
      %v447 = vld [vmem:[%s237 + $0x28] sm:$0xff]
      %v448 = vld [vmem:[%s237 + $0x30] sm:$0xff]
      %v449 = vld [vmem:[%s237 + $0x38] sm:$0xff]
      %v450 = vmul.f32 %v418, %v442
      %v451 = vmul.f32 %v419, %v443
      %v452 = vmul.f32 %v420, %v444
      %v453 = vmul.f32 %v421, %v445
      %v454 = vmul.f32 %v422, %v446
      %v455 = vmul.f32 %v423, %v447
      %v456 = vmul.f32 %v424, %v448
      %v457 = vmul.f32 %v425, %v449
      %v458 = vadd.f32 %v434, %v450
      %v459 = vadd.f32 %v435, %v451
      %v460 = vadd.f32 %v436, %v452
      %v461 = vadd.f32 %v437, %v453
      %v462 = vadd.f32 %v438, %v454
      %v463 = vadd.f32 %v439, %v455
      %v464 = vadd.f32 %v440, %v456
      %v465 = vadd.f32 %v441, %v457
      %466 = vst [vmem:[%s246] sm:$0xff] %v458
      %467 = vst [vmem:[%s246 + $0x8] sm:$0xff] %v459
      %468 = vst [vmem:[%s246 + $0x10] sm:$0xff] %v460
      %469 = vst [vmem:[%s246 + $0x18] sm:$0xff] %v461
      %470 = vst [vmem:[%s246 + $0x20] sm:$0xff] %v462
      %471 = vst [vmem:[%s246 + $0x28] sm:$0xff] %v463
      %472 = vst [vmem:[%s246 + $0x30] sm:$0xff] %v464
      %473 = vst [vmem:[%s246 + $0x38] sm:$0xff] %v465
      %p474 = scmp.lt.s32.totalorder %s19, 1
      %s475 = scalar_select %p474, %s19, 1
      %p476 = scmp.lt.s32.totalorder %s18, 0
      %s477 = scalar_select %p476, %s18, 0
      %s478 = smul.addr %s477, 8
      %s479 = smul.addr %s475, 8
      %s480 = sadd.s32 %s478, %s479
      %s481 = smul.addr %s480, 8
      %s482 = scalar_lea.vmem %s3, %s481
      // Predicated region
      $region33: #{_rope_forward.1} parent=31 // pred_check
        %p483 = pneg %p126
      $region34: #{_rope_forward.1} parent=31 // pred_check_branch
        %485 = sbr.rel (%p483) target = $region36
      $region35: #{_rope_forward.1} parent=31 // pred_region
        _
      $region36: #{_rope_forward.1} parent=31 // pred_fallthru
        _
    $region32: #{_rope_forward.1} parent=5 // pred_fallthru
      _
    %p486 = scmp.le.s32.totalorder 2, %s9
    // Predicated region
    $region37: #{_rope_forward.1} parent=5 // pred_check
      %p487 = pneg %p486
    $region38: #{_rope_forward.1} parent=5 // pred_check_branch
      %489 = sbr.rel (%p487) target = $region40
    $region39: #{_rope_forward.1} parent=5 // pred_region
      %s490 = ssub.s32 %s9, 2
      // Predicated region
      $region41: #{_rope_forward.1} parent=39 // pred_check
        %p491 = pneg %p132
      $region42: #{_rope_forward.1} parent=39 // pred_check_branch
        %493 = sbr.rel (%p491) target = $region44
      $region43: #{_rope_forward.1} parent=39 // pred_region
        %p494 = scmp.lt.s32.totalorder %s21, 1
        %s495 = scalar_select %p494, %s21, 1
        %p496 = scmp.lt.s32.totalorder %s20, 0
        %s497 = scalar_select %p496, %s20, 0
        %s498 = smul.addr %s497, 8
        %s499 = smul.addr %s495, 8
        %s500 = sadd.s32 %s498, %s499
        %s501 = smul.addr %s500, 8
        %s502 = scalar_lea.vmem %s3, %s501
      $region44: #{_rope_forward.1} parent=39 // pred_fallthru
        _
    $region40: #{_rope_forward.1} parent=5 // pred_fallthru
      _
  $region6: #{_rope_forward.1} parent=0 // loop_footer
    %s13 = sadd.s32 1, %s9
  $region7: #{_rope_forward.1} parent=0 // loop_footer_branch
    %8 = sbr.rel target = $region3
  $region8: #{_rope_forward.1} parent=0 // loop_exit
    _

</llo_original>
